<compile_context>
chip_gen: v6e
topology: v6e:2x2x1
jax: 0.10.0
libtpu: 0.0.40
codegen_flags: <defaults>
</compile_context>

<pallas_src>
import functools

import jax
import jax.numpy as jnp
from jax.experimental import pallas as pl
from jax.experimental.pallas import tpu as pltpu


def _round_up(x, m):
    return ((x + m - 1) // m) * m


def _layernorm_kernel(x_ref, w_ref, b_ref, o_ref, *, eps, true_f, pad_f):
    # x_ref/o_ref: (TILE_N, F_pad); w_ref/b_ref: (1, F_pad) float32 (zeros in padded lanes).
    inv_f = jnp.float32(1.0 / true_f)

    # Pass 1: row sums -> means. Streaming read of the tile; upcast inside the reduce.
    mean = jnp.sum(x_ref[...].astype(jnp.float32), axis=-1, keepdims=True) * inv_f

    # Pass 2: centered sum-of-squares (two-pass variance; no E[x^2]-mean^2 cancellation).
    xc = x_ref[...].astype(jnp.float32) - mean
    ssq = jnp.sum(xc * xc, axis=-1, keepdims=True)
    if pad_f:
        # Each zero-padded lane contributed mean^2 to the centered sum; remove it.
        ssq = ssq - jnp.float32(pad_f) * (mean * mean)
    var = jnp.maximum(ssq * inv_f, 0.0)
    inv_std = jax.lax.rsqrt(var + jnp.float32(eps))

    # Affine in f32 (correct on v5e, which has no bf16 VALU); padded lanes -> 0 via w/b = 0.
    y = xc * inv_std * w_ref[...] + b_ref[...]
    o_ref[...] = y.astype(o_ref.dtype)


def _choose_tile_n(n, f, itemsize):
    """Multiple-of-8 row tile targeting ~4 MiB per input buffer, with >=2 grid steps when N allows."""
    target_bytes = 4 * 1024 * 1024
    tile = max(8, ((target_bytes // max(1, f * itemsize)) // 8) * 8)
    if n <= 8:
        return n  # block dim == full array dim is always legal
    # Keep at least 2 (balanced) grid steps so both v7x TensorCores stream.
    num_tiles = max(2, pl.cdiv(n, tile))
    tile = min(tile, _round_up(pl.cdiv(n, num_tiles), 8))
    return max(8, tile)


def layer_norm_pallas(x, weight, bias, eps=1e-5, tile_n=None):
    """LayerNorm over all non-batch dims of `x` via a row-tiled streaming Pallas kernel."""
    n = x.shape[0]
    feat_shape = x.shape[1:]
    x2d = x.reshape(n, -1)
    f = x2d.shape[1]

    # Lane-dense feature axis: pad F up to a multiple of 128 (zeros) when needed.
    pad = _round_up(f, 128) - f
    if pad:
        x2d = jnp.pad(x2d, ((0, 0), (0, pad)))
    fp = f + pad

    # weight/bias are tiny: flatten to (1, F_pad), pre-cast to f32 once, keep VMEM-resident.
    w2d = weight.reshape(1, f).astype(jnp.float32)
    b2d = bias.reshape(1, f).astype(jnp.float32)
    if pad:
        w2d = jnp.pad(w2d, ((0, 0), (0, pad)))
        b2d = jnp.pad(b2d, ((0, 0), (0, pad)))

    itemsize = x2d.dtype.itemsize
    if tile_n is None:
        tile_n = _choose_tile_n(n, fp, itemsize)
    grid = (pl.cdiv(n, tile_n),)

    cost = pl.CostEstimate(
        flops=int(8 * n * fp),
        transcendentals=int(n),
        bytes_accessed=int(2 * n * fp * itemsize + 2 * fp * 4),
    )

    out2d = pl.pallas_call(
        functools.partial(_layernorm_kernel, eps=eps, true_f=f, pad_f=pad),
        out_shape=jax.ShapeDtypeStruct((n, fp), x2d.dtype),
        grid_spec=pltpu.PrefetchScalarGridSpec(
            num_scalar_prefetch=0,
            grid=grid,
            in_specs=[
                pl.BlockSpec((tile_n, fp), lambda i: (i, 0)),
                pl.BlockSpec((1, fp), lambda i: (0, 0)),
                pl.BlockSpec((1, fp), lambda i: (0, 0)),
            ],
            out_specs=pl.BlockSpec((tile_n, fp), lambda i: (i, 0)),
        ),
        compiler_params=pltpu.CompilerParams(
            # Rows are independent -> parallel; shards grid steps across the 2 TCs on v7x.
            dimension_semantics=("parallel",),
            # Cover double-buffered ~4 MiB in+out tiles plus f32 temps on every generation.
            vmem_limit_bytes=48 * 1024 * 1024,
        ),
        cost_estimate=cost,
    )(x2d, w2d, b2d)

    if pad:
        out2d = out2d[:, :f]
    return out2d.reshape((n,) + feat_shape)


def _reference(x, weight, bias, eps):
    n = x.shape[0]
    xf = x.reshape(n, -1).astype(jnp.float32)
    mean = xf.mean(axis=-1, keepdims=True)
    var = ((xf - mean) ** 2).mean(axis=-1, keepdims=True)
    y = (xf - mean) / jnp.sqrt(var + eps)
    y = y * weight.reshape(1, -1).astype(jnp.float32) + bias.reshape(1, -1).astype(jnp.float32)
    return y.reshape(x.shape).astype(x.dtype)


if __name__ == "__main__":
    key = jax.random.PRNGKey(0)

    # Main shape: N=2, C=4, H=W=16 -> F = 1024 (lane-dense multiple of 128).
    N, C, H, W = 2, 4, 16, 16
    x = jax.random.normal(key, (N, C, H, W), dtype=jnp.float32)

    # Parameters as in LayerNorm.reset_parameters(): weight=ones, bias=zeros,
    # normalized_shape = input.shape[1:].
    weight = jnp.ones((C, H, W), dtype=jnp.float32)
    bias = jnp.zeros((C, H, W), dtype=jnp.float32)

    out = jax.block_until_ready(layer_norm_pallas(x, weight, bias, eps=1e-5))
    ref = _reference(x, weight, bias, 1e-5)
    assert jnp.allclose(out, ref, atol=1e-4, rtol=1e-4), "mismatch vs reference (main)"

    # Multi-step row grid with a partial last block (N=20, forced TILE_N=8 -> grid of 3).
    x2 = jax.random.normal(jax.random.PRNGKey(1), (20, C, H, W), dtype=jnp.float32)
    w2 = jax.random.normal(jax.random.PRNGKey(2), (C, H, W), dtype=jnp.float32)
    b2 = jax.random.normal(jax.random.PRNGKey(3), (C, H, W), dtype=jnp.float32)
    out2 = jax.block_until_ready(layer_norm_pallas(x2, w2, b2, eps=1e-5, tile_n=8))
    ref2 = _reference(x2, w2, b2, 1e-5)
    assert jnp.allclose(out2, ref2, atol=1e-4, rtol=1e-4), "mismatch vs reference (tiled)"

    # Non-lane-dense feature count (F = 3*5*7 = 105 -> padded to 128 in the wrapper).
    x3 = jax.random.normal(jax.random.PRNGKey(4), (4, 3, 5, 7), dtype=jnp.float32)
    w3 = jax.random.normal(jax.random.PRNGKey(5), (3, 5, 7), dtype=jnp.float32)
    b3 = jax.random.normal(jax.random.PRNGKey(6), (3, 5, 7), dtype=jnp.float32)
    out3 = jax.block_until_ready(layer_norm_pallas(x3, w3, b3, eps=1e-5))
    ref3 = _reference(x3, w3, b3, 1e-5)
    assert jnp.allclose(out3, ref3, atol=1e-4, rtol=1e-4), "mismatch vs reference (padded F)"

    # bf16 I/O path (f32 math inside; loose tolerance for the bf16 output cast).
    x4 = jax.random.normal(jax.random.PRNGKey(7), (16, C, H, W), dtype=jnp.bfloat16)
    w4 = jnp.ones((C, H, W), dtype=jnp.bfloat16)
    b4 = jnp.zeros((C, H, W), dtype=jnp.bfloat16)
    out4 = jax.block_until_ready(layer_norm_pallas(x4, w4, b4, eps=1e-5))
    ref4 = _reference(x4, w4, b4, 1e-5)
    assert jnp.allclose(out4.astype(jnp.float32), ref4.astype(jnp.float32),
                        atol=5e-2, rtol=5e-2), "mismatch vs reference (bf16)"

    print("KERNEL_OK")
</pallas_src>

<mosaic_0001>
module attributes {stable_mosaic.version = 11 : i64} {
  func.func @_layernorm_kernel(%arg0: i32, %arg1: memref<2x1024xf32, #tpu.memory_space<vmem>>, %arg2: memref<1x1024xf32, #tpu.memory_space<vmem>>, %arg3: memref<1x1024xf32, #tpu.memory_space<vmem>>, %arg4: memref<2x1024xf32, #tpu.memory_space<vmem>>) attributes {dimension_semantics = [#tpu.dimension_semantics<parallel>], iteration_bounds = array<i64: 1>, scalar_prefetch = 0 : i64, scratch_operands = 0 : i64, tpu.core_type = #tpu.core_type<tc>, window_params = [{transform_indices = @transform_0, window_bounds = array<i64: 2, 1024>}, {pipeline_mode = #tpu.pipeline_mode<synchronous>, transform_indices = @transform_1, window_bounds = array<i64: 1, 1024>}, {pipeline_mode = #tpu.pipeline_mode<synchronous>, transform_indices = @transform_2, window_bounds = array<i64: 1, 1024>}, {transform_indices = @transform_3, window_bounds = array<i64: 2, 1024>}]} {
    %c0 = arith.constant 0 : index
    %c0_0 = arith.constant 0 : index
    %0 = vector.load %arg1[%c0, %c0_0] : memref<2x1024xf32, #tpu.memory_space<vmem>>, vector<2x1024xf32>
    %cst = arith.constant dense<0.000000e+00> : vector<2xf32>
    %1 = vector.multi_reduction <add>, %0, %cst [1] : vector<2x1024xf32> to vector<2xf32>
    %2 = vector.shape_cast %1 : vector<2xf32> to vector<2x1xf32>
    %cst_1 = arith.constant 9.765625E-4 : f32
    %3 = vector.broadcast %cst_1 : f32 to vector<2x1xf32>
    %4 = arith.mulf %2, %3 : vector<2x1xf32>
    %c0_2 = arith.constant 0 : index
    %c0_3 = arith.constant 0 : index
    %5 = vector.load %arg1[%c0_2, %c0_3] : memref<2x1024xf32, #tpu.memory_space<vmem>>, vector<2x1024xf32>
    %6 = vector.broadcast %4 : vector<2x1xf32> to vector<2x1024xf32>
    %7 = arith.subf %5, %6 : vector<2x1024xf32>
    %8 = arith.mulf %7, %7 : vector<2x1024xf32>
    %cst_4 = arith.constant dense<0.000000e+00> : vector<2xf32>
    %9 = vector.multi_reduction <add>, %8, %cst_4 [1] : vector<2x1024xf32> to vector<2xf32>
    %10 = vector.shape_cast %9 : vector<2xf32> to vector<2x1xf32>
    %cst_5 = arith.constant 9.765625E-4 : f32
    %11 = vector.broadcast %cst_5 : f32 to vector<2x1xf32>
    %12 = arith.mulf %10, %11 : vector<2x1xf32>
    %cst_6 = arith.constant 0.000000e+00 : f32
    %13 = vector.broadcast %cst_6 : f32 to vector<2x1xf32>
    %14 = arith.maximumf %12, %13 : vector<2x1xf32>
    %cst_7 = arith.constant 9.99999974E-6 : f32
    %15 = vector.broadcast %cst_7 : f32 to vector<2x1xf32>
    %16 = arith.addf %14, %15 : vector<2x1xf32>
    %17 = math.rsqrt %16 : vector<2x1xf32>
    %18 = vector.broadcast %17 : vector<2x1xf32> to vector<2x1024xf32>
    %19 = arith.mulf %7, %18 : vector<2x1024xf32>
    %c0_8 = arith.constant 0 : index
    %c0_9 = arith.constant 0 : index
    %20 = vector.load %arg2[%c0_8, %c0_9] : memref<1x1024xf32, #tpu.memory_space<vmem>>, vector<1x1024xf32>
    %21 = vector.broadcast %20 : vector<1x1024xf32> to vector<2x1024xf32>
    %22 = arith.mulf %19, %21 : vector<2x1024xf32>
    %c0_10 = arith.constant 0 : index
    %c0_11 = arith.constant 0 : index
    %23 = vector.load %arg3[%c0_10, %c0_11] : memref<1x1024xf32, #tpu.memory_space<vmem>>, vector<1x1024xf32>
    %24 = vector.broadcast %23 : vector<1x1024xf32> to vector<2x1024xf32>
    %25 = arith.addf %22, %24 : vector<2x1024xf32>
    %c0_12 = arith.constant 0 : index
    %c0_13 = arith.constant 0 : index
    %26 = vector.load %arg4[%c0_12, %c0_13] : memref<2x1024xf32, #tpu.memory_space<vmem>>, vector<2x1024xf32>
    tpu.vector_store %arg4[%c0_12, %c0_13], %25 {strides = array<i32>} : memref<2x1024xf32, #tpu.memory_space<vmem>>, vector<2x1024xf32>,
    return
  }
  func.func @transform_0(%arg0: i32) -> (i32, i32) {
    %c0_i32 = arith.constant 0 : i32
    %c0_i32_0 = arith.constant 0 : i32
    return %arg0, %c0_i32 : i32, i32
  }
  func.func @transform_1(%arg0: i32) -> (i32, i32) {
    %c0_i32 = arith.constant 0 : i32
    %c0_i32_0 = arith.constant 0 : i32
    %c0_i32_1 = arith.constant 0 : i32
    return %c0_i32, %c0_i32_0 : i32, i32
  }
  func.func @transform_2(%arg0: i32) -> (i32, i32) {
    %c0_i32 = arith.constant 0 : i32
    %c0_i32_0 = arith.constant 0 : i32
    %c0_i32_1 = arith.constant 0 : i32
    return %c0_i32, %c0_i32_0 : i32, i32
  }
  func.func @transform_3(%arg0: i32) -> (i32, i32) {
    %c0_i32 = arith.constant 0 : i32
    %c0_i32_0 = arith.constant 0 : i32
    return %arg0, %c0_i32 : i32, i32
  }
}

</mosaic_0001>

<llo_original>
// kernel: tpu_custom_call.1
$region0: #{tpu_custom_call.1}
  #allocation0 [shape = 'u32[]', space=smem, size = 0x4, offset = 0x4, fixed_abs, tag = 'smem constant byte address 0x4 - core index']
  #allocation1 [shape = 'u32[144,128]{1,0:T(1,128)}', space=vmem, size = 0x12000, scoped, tag = 'internal scratch']
  %s0 = inlined_call_operand.hbm [shape: f32[2,1024], index: 0, kind: input, shape index: {}]
  %s1 = inlined_call_operand.hbm [shape: f32[1,1024], index: 1, kind: input, shape index: {}]
  %s2 = inlined_call_operand.hbm [shape: f32[1,1024], index: 2, kind: input, shape index: {}]
  %s3 = inlined_call_operand.hbm [shape: f32[2,1024], index: 3, kind: output, shape index: {}]
  %s4 = sld [smem:[#allocation0]]
  $region34: #{tpu_custom_call.1} parent=0
    _
  %s6 = ssub.s32 1, %s4
  %s7 = scalar_select 0, %s6, %s4
  $region1: #{tpu_custom_call.1} parent=0
    #allocation2 [shape = 'u8[8192]{0}', space=vmem, size = 0x2000, scoped, tag = 'input window, operand 0, single buffered']
    #allocation3 [shape = 's32[1]{0}', space=sflag, size = 0x4, scoped, tag = 'scoped memory for tpu_custom_call.1']
    #allocation4 [shape = 's32[1]{0}', space=sflag, size = 0x4, scoped, tag = 'scoped memory for tpu_custom_call.1']
    #allocation5 [shape = 'u8[4096]{0}', space=vmem, size = 0x1000, scoped, tag = 'input window, operand 1, single buffered']
    #allocation6 [shape = 's32[1]{0}', space=sflag, size = 0x4, scoped, tag = 'scoped memory for tpu_custom_call.1']
    #allocation7 [shape = 'u8[4096]{0}', space=vmem, size = 0x1000, scoped, tag = 'input window, operand 2, single buffered']
    #allocation8 [shape = 'u8[8192]{0}', space=vmem, size = 0x2000, scoped, tag = 'output window, operand 0, single buffered']
    %8 = vsyncpa [#allocation3], 0
    %9 = vsyncpa [#allocation6], 0
    %10 = vsyncpa [#allocation4], 0
    // Predicated region
    $region2: #{tpu_custom_call.1} parent=1 // pred_check
      _
    $region3: #{tpu_custom_call.1} parent=1 // pred_check_branch
      %12 = sbr.rel (0) target = $region5
    $region4: #{tpu_custom_call.1} parent=1 // pred_region
      %s14 = ssub.s32 256, 256
      %15 = vsyncadd [#allocation3], %s14
      %s17 = sshll.u32 [#allocation2], 4
      %s18 = int_to_ptr.vmem [resolvable:$true] %s17
      %20 = dma.hbm_to_vmem [thread:$0]  %s0, 256, %s18, [#allocation3]
    $region5: #{tpu_custom_call.1} parent=1 // pred_fallthru
      _
    // Predicated region
    $region6: #{tpu_custom_call.1} parent=1 // pred_check
      _
    $region7: #{tpu_custom_call.1} parent=1 // pred_check_branch
      %22 = sbr.rel (0) target = $region9
    $region8: #{tpu_custom_call.1} parent=1 // pred_region
      %s24 = ssub.s32 128, 128
      %25 = vsyncadd [#allocation6], %s24
      %s27 = sshll.u32 [#allocation5], 4
      %s28 = int_to_ptr.vmem [resolvable:$true] %s27
      %30 = dma.hbm_to_vmem [thread:$0]  %s1, 128, %s28, [#allocation6]
    $region9: #{tpu_custom_call.1} parent=1 // pred_fallthru
      _
    // Predicated region
    $region10: #{tpu_custom_call.1} parent=1 // pred_check
      _
    $region11: #{tpu_custom_call.1} parent=1 // pred_check_branch
      %32 = sbr.rel (0) target = $region13
    $region12: #{tpu_custom_call.1} parent=1 // pred_region
      %s34 = ssub.s32 128, 128
      %35 = vsyncadd [#allocation6], %s34
      %s37 = sshll.u32 [#allocation7], 4
      %s38 = int_to_ptr.vmem [resolvable:$true] %s37
      %40 = dma.hbm_to_vmem [thread:$0]  %s2, 128, %s38, [#allocation6]
    $region13: #{tpu_custom_call.1} parent=1 // pred_fallthru
      _
    // Predicated region
    $region14: #{tpu_custom_call.1} parent=1 // pred_check
      _
    $region15: #{tpu_custom_call.1} parent=1 // pred_check_branch
      %42 = sbr.rel (0) target = $region17
    $region16: #{tpu_custom_call.1} parent=1 // pred_region
      %43 = dma.done [#allocation3], 256
    $region17: #{tpu_custom_call.1} parent=1 // pred_fallthru
      _
    // Predicated region
    $region18: #{tpu_custom_call.1} parent=1 // pred_check
      _
    $region19: #{tpu_custom_call.1} parent=1 // pred_check_branch
      %45 = sbr.rel (0) target = $region21
    $region20: #{tpu_custom_call.1} parent=1 // pred_region
      %46 = dma.done [#allocation6], 128
    $region21: #{tpu_custom_call.1} parent=1 // pred_fallthru
      _
    // Predicated region
    $region22: #{tpu_custom_call.1} parent=1 // pred_check
      _
    $region23: #{tpu_custom_call.1} parent=1 // pred_check_branch
      %48 = sbr.rel (0) target = $region25
    $region24: #{tpu_custom_call.1} parent=1 // pred_region
      %49 = dma.done [#allocation6], 128
    $region25: #{tpu_custom_call.1} parent=1 // pred_fallthru
      _
    %v50 = vld [vmem:[#allocation2] sm:$0xff]
    %v51 = vld [vmem:[#allocation2 + $0x8] sm:$0xff]
    %v54 = vcombine.high %v50, %v50
    %v56 = vunpack.c.l.s4 1983009808
    %v57 = vunpack.c.0.s8 %v56
    %v58 = vlaneseq
    %v59 = vshrl.u32 %v58, 7
    %v60 = vsub.s32 %v57, %v59
    %v61 = vrot.slane %v50, %v60
    %v63 = vunpack.c.l.s4 1983009808
    %v64 = vunpack.c.0.s8 %v63
    %v65 = vlaneseq
    %v66 = vshrl.u32 %v65, 7
    %v67 = vsub.s32 %v64, %v66
    %v68 = vrot.slane %v54, %v67
    %v69 = vcombine.high %v61, %v61
    %v70 = vcombine.high %v68, %v68
    %v71 = vcombine.high %v51, %v51
    %v73 = vunpack.c.l.s4 1983009808
    %v74 = vunpack.c.0.s8 %v73
    %v75 = vlaneseq
    %v76 = vshrl.u32 %v75, 7
    %v77 = vsub.s32 %v74, %v76
    %v78 = vrot.slane %v51, %v77
    %v80 = vunpack.c.l.s4 1983009808
    %v81 = vunpack.c.0.s8 %v80
    %v82 = vlaneseq
    %v83 = vshrl.u32 %v82, 7
    %v84 = vsub.s32 %v81, %v83
    %v85 = vrot.slane %v71, %v84
    %v86 = vcombine.high %v78, %v78
    %v87 = vcombine.high %v85, %v85
    %vm96 = vcmask 1041408
    %v97 = vsel %vm96, %v61, 0.0
    %v98 = vsel %vm96, %v69, 0.0
    %v99 = vadd.f32 %v97, %v98
    %v100 = vsel %vm96, %v68, 0.0
    %v101 = vadd.f32 %v99, %v100
    %v102 = vsel %vm96, %v70, 0.0
    %v103 = vadd.f32 %v101, %v102
    %v104 = vsel %vm96, %v78, 0.0
    %v105 = vadd.f32 %v103, %v104
    %v106 = vsel %vm96, %v86, 0.0
    %v107 = vadd.f32 %v105, %v106
    %v108 = vsel %vm96, %v85, 0.0
    %v109 = vadd.f32 %v107, %v108
    %v110 = vsel %vm96, %v87, 0.0
    %v111 = vadd.f32 %v109, %v110
    %112 = vadd.xlane.f32.xlu0 %v111
    %v113 = vpop.xlane.xlu0 %112
    %v114 = vmul.f32 %v113, 0.0009765625
    %v117 = vunpack.c.l.s4 269488144
    %v118 = vunpack.c.0.s8 %v117
    %v119 = vlaneseq
    %v120 = vshrl.u32 %v119, 7
    %v121 = vsub.s32 %v118, %v120
    %v122 = vrot.slane %v114, %v121
    %v124 = vsub.f32 %v50, %v122
    %v125 = vsub.f32 %v51, %v122
    %v126 = vmul.f32 %v124, %v124
    %v127 = vmul.f32 %v125, %v125
    %v130 = vcombine.high %v126, %v126
    %v132 = vunpack.c.l.s4 1983009808
    %v133 = vunpack.c.0.s8 %v132
    %v134 = vlaneseq
    %v135 = vshrl.u32 %v134, 7
    %v136 = vsub.s32 %v133, %v135
    %v137 = vrot.slane %v126, %v136
    %v139 = vunpack.c.l.s4 1983009808
    %v140 = vunpack.c.0.s8 %v139
    %v141 = vlaneseq
    %v142 = vshrl.u32 %v141, 7
    %v143 = vsub.s32 %v140, %v142
    %v144 = vrot.slane %v130, %v143
    %v145 = vcombine.high %v137, %v137
    %v146 = vcombine.high %v144, %v144
    %v147 = vcombine.high %v127, %v127
    %v149 = vunpack.c.l.s4 1983009808
    %v150 = vunpack.c.0.s8 %v149
    %v151 = vlaneseq
    %v152 = vshrl.u32 %v151, 7
    %v153 = vsub.s32 %v150, %v152
    %v154 = vrot.slane %v127, %v153
    %v156 = vunpack.c.l.s4 1983009808
    %v157 = vunpack.c.0.s8 %v156
    %v158 = vlaneseq
    %v159 = vshrl.u32 %v158, 7
    %v160 = vsub.s32 %v157, %v159
    %v161 = vrot.slane %v147, %v160
    %v162 = vcombine.high %v154, %v154
    %v163 = vcombine.high %v161, %v161
    %v172 = vsel %vm96, %v137, 0.0
    %v173 = vsel %vm96, %v145, 0.0
    %v174 = vadd.f32 %v172, %v173
    %v175 = vsel %vm96, %v144, 0.0
    %v176 = vadd.f32 %v174, %v175
    %v177 = vsel %vm96, %v146, 0.0
    %v178 = vadd.f32 %v176, %v177
    %v179 = vsel %vm96, %v154, 0.0
    %v180 = vadd.f32 %v178, %v179
    %v181 = vsel %vm96, %v162, 0.0
    %v182 = vadd.f32 %v180, %v181
    %v183 = vsel %vm96, %v161, 0.0
    %v184 = vadd.f32 %v182, %v183
    %v185 = vsel %vm96, %v163, 0.0
    %v186 = vadd.f32 %v184, %v185
    %187 = vadd.xlane.f32.xlu0 %v186
    %v188 = vpop.xlane.xlu0 %187
    %v189 = vmul.f32 %v188, 0.0009765625
    %v190 = vmax.f32 %v189, 0.0
    %v191 = vadd.f32 %v190, 1e-05
    %v192 = vrsqrt.pop %v191
    %v195 = vunpack.c.l.s4 269488144
    %v196 = vunpack.c.0.s8 %v195
    %v197 = vlaneseq
    %v198 = vshrl.u32 %v197, 7
    %v199 = vsub.s32 %v196, %v198
    %v200 = vrot.slane %v192, %v199
    %v202 = vmul.f32 %v124, %v200
    %v203 = vmul.f32 %v125, %v200
    %v204 = vld [vmem:[#allocation5] sm:$0xff]
    %v206 = vlaneseq
    %v207 = vshrl.u32 %v206, 7
    %v208 = vsub.s32 0, %v207
    %v209 = vrot.slane %v204, %v208
    %v210 = vlaneseq
    %v211 = vshrl.u32 %v210, 7
    %v212 = vsub.s32 1, %v211
    %v213 = vrot.slane %v204, %v212
    %v214 = vlaneseq
    %v215 = vshrl.u32 %v214, 7
    %v216 = vsub.s32 2, %v215
    %v217 = vrot.slane %v204, %v216
    %v218 = vlaneseq
    %v219 = vshrl.u32 %v218, 7
    %v220 = vsub.s32 3, %v219
    %v221 = vrot.slane %v204, %v220
    %v222 = vlaneseq
    %v223 = vshrl.u32 %v222, 7
    %v224 = vsub.s32 4, %v223
    %v225 = vrot.slane %v204, %v224
    %v226 = vlaneseq
    %v227 = vshrl.u32 %v226, 7
    %v228 = vsub.s32 5, %v227
    %v229 = vrot.slane %v204, %v228
    %v230 = vlaneseq
    %v231 = vshrl.u32 %v230, 7
    %v232 = vsub.s32 6, %v231
    %v233 = vrot.slane %v204, %v232
    %v234 = vlaneseq
    %v235 = vshrl.u32 %v234, 7
    %v236 = vsub.s32 7, %v235
    %v237 = vrot.slane %v204, %v236
    %v238 = vcombine.low %v209, %v213
    %v239 = vcombine.low %v217, %v221
    %v241 = vunpack.c.l.s4 1983009808
    %v242 = vunpack.c.0.s8 %v241
    %v243 = vlaneseq
    %v244 = vshrl.u32 %v243, 7
    %v245 = vsub.s32 %v242, %v244
    %v246 = vrot.slane %v238, %v245
    %v248 = vunpack.c.l.s4 1983009808
    %v249 = vunpack.c.0.s8 %v248
    %v250 = vlaneseq
    %v251 = vshrl.u32 %v250, 7
    %v252 = vsub.s32 %v249, %v251
    %v253 = vrot.slane %v239, %v252
    %v254 = vcombine.low %v246, %v253
    %v255 = vcombine.low %v225, %v229
    %v256 = vcombine.low %v233, %v237
    %v258 = vunpack.c.l.s4 1983009808
    %v259 = vunpack.c.0.s8 %v258
    %v260 = vlaneseq
    %v261 = vshrl.u32 %v260, 7
    %v262 = vsub.s32 %v259, %v261
    %v263 = vrot.slane %v255, %v262
    %v265 = vunpack.c.l.s4 1983009808
    %v266 = vunpack.c.0.s8 %v265
    %v267 = vlaneseq
    %v268 = vshrl.u32 %v267, 7
    %v269 = vsub.s32 %v266, %v268
    %v270 = vrot.slane %v256, %v269
    %v271 = vcombine.low %v263, %v270
    %v274 = vmul.f32 %v202, %v254
    %v275 = vmul.f32 %v203, %v271
    %v276 = vld [vmem:[#allocation7] sm:$0xff]
    %v278 = vlaneseq
    %v279 = vshrl.u32 %v278, 7
    %v280 = vsub.s32 0, %v279
    %v281 = vrot.slane %v276, %v280
    %v282 = vlaneseq
    %v283 = vshrl.u32 %v282, 7
    %v284 = vsub.s32 1, %v283
    %v285 = vrot.slane %v276, %v284
    %v286 = vlaneseq
    %v287 = vshrl.u32 %v286, 7
    %v288 = vsub.s32 2, %v287
    %v289 = vrot.slane %v276, %v288
    %v290 = vlaneseq
    %v291 = vshrl.u32 %v290, 7
    %v292 = vsub.s32 3, %v291
    %v293 = vrot.slane %v276, %v292
    %v294 = vlaneseq
    %v295 = vshrl.u32 %v294, 7
    %v296 = vsub.s32 4, %v295
    %v297 = vrot.slane %v276, %v296
    %v298 = vlaneseq
    %v299 = vshrl.u32 %v298, 7
    %v300 = vsub.s32 5, %v299
    %v301 = vrot.slane %v276, %v300
    %v302 = vlaneseq
    %v303 = vshrl.u32 %v302, 7
    %v304 = vsub.s32 6, %v303
    %v305 = vrot.slane %v276, %v304
    %v306 = vlaneseq
    %v307 = vshrl.u32 %v306, 7
    %v308 = vsub.s32 7, %v307
    %v309 = vrot.slane %v276, %v308
    %v310 = vcombine.low %v281, %v285
    %v311 = vcombine.low %v289, %v293
    %v313 = vunpack.c.l.s4 1983009808
    %v314 = vunpack.c.0.s8 %v313
    %v315 = vlaneseq
    %v316 = vshrl.u32 %v315, 7
    %v317 = vsub.s32 %v314, %v316
    %v318 = vrot.slane %v310, %v317
    %v320 = vunpack.c.l.s4 1983009808
    %v321 = vunpack.c.0.s8 %v320
    %v322 = vlaneseq
    %v323 = vshrl.u32 %v322, 7
    %v324 = vsub.s32 %v321, %v323
    %v325 = vrot.slane %v311, %v324
    %v326 = vcombine.low %v318, %v325
    %v327 = vcombine.low %v297, %v301
    %v328 = vcombine.low %v305, %v309
    %v330 = vunpack.c.l.s4 1983009808
    %v331 = vunpack.c.0.s8 %v330
    %v332 = vlaneseq
    %v333 = vshrl.u32 %v332, 7
    %v334 = vsub.s32 %v331, %v333
    %v335 = vrot.slane %v327, %v334
    %v337 = vunpack.c.l.s4 1983009808
    %v338 = vunpack.c.0.s8 %v337
    %v339 = vlaneseq
    %v340 = vshrl.u32 %v339, 7
    %v341 = vsub.s32 %v338, %v340
    %v342 = vrot.slane %v328, %v341
    %v343 = vcombine.low %v335, %v342
    %v346 = vadd.f32 %v274, %v326
    %v347 = vadd.f32 %v275, %v343
    %348 = vst [vmem:[#allocation8] sm:$0xff] %v346
    %349 = vst [vmem:[#allocation8 + $0x8] sm:$0xff] %v347
    // Predicated region
    $region26: #{tpu_custom_call.1} parent=1 // pred_check
      _
    $region27: #{tpu_custom_call.1} parent=1 // pred_check_branch
      %351 = sbr.rel (0) target = $region29
    $region28: #{tpu_custom_call.1} parent=1 // pred_region
      %s353 = ssub.s32 256, 256
      %354 = vsyncadd [#allocation4], %s353
      %s356 = sshll.u32 [#allocation8], 4
      %s357 = int_to_ptr.vmem [resolvable:$true] %s356
      %359 = dma.vmem_to_hbm [thread:$0]  %s357, 256, %s3, [#allocation4]
    $region29: #{tpu_custom_call.1} parent=1 // pred_fallthru
      _
    // Predicated region
    $region30: #{tpu_custom_call.1} parent=1 // pred_check
      _
    $region31: #{tpu_custom_call.1} parent=1 // pred_check_branch
      %361 = sbr.rel (0) target = $region33
    $region32: #{tpu_custom_call.1} parent=1 // pred_region
      %362 = dma.done [#allocation4], 256
    $region33: #{tpu_custom_call.1} parent=1 // pred_fallthru
      _
    %363 = vsyncpa [#allocation3], 1
    %364 = vsyncpa [#allocation6], 1
    %365 = vsyncpa [#allocation4], 1

</llo_original>
